<compile_context>
chip_gen: v6e
topology: v6e:2x2x1
jax: 0.10.0
libtpu: 0.0.40
codegen_flags: <defaults>
</compile_context>

<pallas_src>
import jax
import jax.numpy as jnp
from jax.experimental import pallas as pl
from jax.experimental.pallas import tpu as pltpu


_LANES = 128
_CHUNK = 16                      # sublane rows (of 128 lanes) per inner iter
_ROW_QUANTUM = _CHUNK * _LANES   # 2048: batch padding granularity
# Rows per grid step.  Per step the kernel moves (6+1)*TB*4 = 28*TB bytes; at
# TB=262144 that's ~7 MiB in / ~1 MiB out and a ~14.7 MiB double-buffered
# working set -- inside the 32 MiB scoped-VMEM limit requested below on every
# generation (v5e/v6e physical 128 MiB, v7x physical 64 MiB).
_MAX_BATCH_TILE = 262144


def _sigmoid(z):
    # sigmoid(z) == 0.5 * (1 + tanh(z/2)): one EUP op instead of exp + divide.
    return 0.5 * (1.0 + jnp.tanh(0.5 * z))


def _dense_sigmoid(tiles_in, w_ref, b_ref):
    """tiles_in: list of (_CHUNK, 128) f32 tiles (one per input feature).

    Computes sigmoid(W @ X + b) one output feature at a time as unrolled VPU
    multiply-adds with scalar weights/biases read from SMEM.
    """
    out_dim, in_dim = w_ref.shape
    outs = []
    for j in range(out_dim):
        acc = b_ref[j] + w_ref[j, 0] * tiles_in[0]   # bias folded into 1st MAC
        for k in range(1, in_dim):
            acc = acc + w_ref[j, k] * tiles_in[k]
        outs.append(_sigmoid(acc))
    return outs


def _mlp_kernel(w1_ref, b1_ref, w2_ref, b2_ref, w3_ref, b3_ref, x_ref, o_ref):
    # x_ref block: (6, TB//128, 128) -- batch dense on sublanes and lanes.
    n_feat = x_ref.shape[0]
    n_chunks = x_ref.shape[1] // _CHUNK   # static: TB is a multiple of 2048

    def body(c, carry):
        r0 = pl.multiple_of(c * _CHUNK, _CHUNK)
        feats = [x_ref[k, pl.ds(r0, _CHUNK), :] for k in range(n_feat)]
        h1 = _dense_sigmoid(feats, w1_ref, b1_ref)   # 4 x (_CHUNK, 128)
        h2 = _dense_sigmoid(h1, w2_ref, b2_ref)      # 2 x (_CHUNK, 128)
        h3 = _dense_sigmoid(h2, w3_ref, b3_ref)      # 1 x (_CHUNK, 128)
        o_ref[pl.ds(r0, _CHUNK), :] = h3[0].astype(o_ref.dtype)
        return carry

    jax.lax.fori_loop(0, n_chunks, body, 0)


def _round_up(n, m):
    return ((n + m - 1) // m) * m


def bp_mlp_forward(x, params):
    """x: (B, 6) float32 -> (B, 1) float32, same math as the PyTorch Model."""
    w1, b1, w2, b2, w3, b3 = params
    B, F = x.shape

    # Pad the batch so it is a multiple of the grid tile (min 2048 rows), then
    # pick the largest tile <= _MAX_BATCH_TILE that tiles the padded batch.
    b_min = _round_up(B, _ROW_QUANTUM)
    tb = min(_MAX_BATCH_TILE, b_min)
    b_pad = _round_up(b_min, tb)
    if b_pad != B:
        x = jnp.pad(x, ((0, b_pad - B), (0, 0)))

    # (B_pad, 6) -> (6, B_pad//128, 128): batch fills sublanes AND lanes.
    # TODO(synk): x.T is a standalone XLA relayout (extra HBM round trip of the
    # (B,6) input); feed the input feature-major upstream to eliminate it.
    xt = x.T.reshape(F, b_pad // _LANES, _LANES)

    tiles = tb // _LANES
    grid = (b_pad // tb,)
    smem_spec = pl.BlockSpec(memory_space=pltpu.MemorySpace.SMEM)

    out = pl.pallas_call(
        _mlp_kernel,
        out_shape=jax.ShapeDtypeStruct((b_pad // _LANES, _LANES), x.dtype),
        grid=grid,
        in_specs=[smem_spec] * 6 + [
            pl.BlockSpec((F, tiles, _LANES), lambda i: (0, i, 0)),
        ],
        out_specs=pl.BlockSpec((tiles, _LANES), lambda i: (i, 0)),
        compiler_params=pltpu.CompilerParams(
            dimension_semantics=("parallel",),
            vmem_limit_bytes=32 * 1024 * 1024,
        ),
    )(w1, b1, w2, b2, w3, b3, xt)

    return out.reshape(b_pad, 1)[:B]


def init_params(key):
    """PyTorch-style Linear init, weights stored as (out_features, in_features)."""
    def linear_init(k, fan_in, fan_out):
        kw, kb = jax.random.split(k)
        bound = 1.0 / jnp.sqrt(jnp.float32(fan_in))
        w = jax.random.uniform(kw, (fan_out, fan_in), jnp.float32, -bound, bound)
        b = jax.random.uniform(kb, (fan_out,), jnp.float32, -bound, bound)
        return w, b

    k1, k2, k3 = jax.random.split(key, 3)
    w1, b1 = linear_init(k1, 6, 4)
    w2, b2 = linear_init(k2, 4, 2)
    w3, b3 = linear_init(k3, 2, 1)
    return (w1, b1, w2, b2, w3, b3)


def _reference(x, params):
    w1, b1, w2, b2, w3, b3 = params
    h = jax.nn.sigmoid(x @ w1.T + b1)
    h = jax.nn.sigmoid(h @ w2.T + b2)
    h = jax.nn.sigmoid(h @ w3.T + b3)
    return h


if __name__ == "__main__":
    key = jax.random.PRNGKey(0)
    k_params, k_a, k_b, k_c = jax.random.split(key, 4)
    params = init_params(k_params)

    # Small batch, matching the original module's usage.
    x_small = jax.random.normal(k_a, (8, 6), dtype=jnp.float32)
    out_small = jax.block_until_ready(bp_mlp_forward(x_small, params))
    assert out_small.shape == (8, 1)
    assert jnp.allclose(out_small, _reference(x_small, params), atol=1e-5)

    # Ragged batch (not a multiple of 128) exercises the padding path.
    x_mid = jax.random.normal(k_b, (300, 6), dtype=jnp.float32)
    out_mid = jax.block_until_ready(bp_mlp_forward(x_mid, params))
    assert out_mid.shape == (300, 1)
    assert jnp.allclose(out_mid, _reference(x_mid, params), atol=1e-5)

    # Multi-chunk (sublane-dense inner loop) within a single grid step.
    x_big = jax.random.normal(k_c, (8192, 6), dtype=jnp.float32)
    out_big = jax.block_until_ready(bp_mlp_forward(x_big, params))
    assert out_big.shape == (8192, 1)
    assert jnp.allclose(out_big, _reference(x_big, params), atol=1e-5)

    print("KERNEL_OK")
</pallas_src>

<mosaic_0001>
module attributes {stable_mosaic.version = 11 : i64} {
  func.func @_mlp_kernel(%arg0: i32, %arg1: memref<4x6xf32, #tpu.memory_space<smem>>, %arg2: memref<4xf32, #tpu.memory_space<smem>>, %arg3: memref<2x4xf32, #tpu.memory_space<smem>>, %arg4: memref<2xf32, #tpu.memory_space<smem>>, %arg5: memref<1x2xf32, #tpu.memory_space<smem>>, %arg6: memref<1xf32, #tpu.memory_space<smem>>, %arg7: memref<6x16x128xf32, #tpu.memory_space<vmem>>, %arg8: memref<16x128xf32, #tpu.memory_space<vmem>>) attributes {dimension_semantics = [#tpu.dimension_semantics<parallel>], iteration_bounds = array<i64: 1>, scalar_prefetch = 0 : i64, scratch_operands = 0 : i64, tpu.core_type = #tpu.core_type<tc>, window_params = [{transform_indices = @transform_0, window_bounds = array<i64: 4, 6>}, {transform_indices = @transform_1, window_bounds = array<i64: 4>}, {transform_indices = @transform_2, window_bounds = array<i64: 2, 4>}, {transform_indices = @transform_3, window_bounds = array<i64: 2>}, {transform_indices = @transform_4, window_bounds = array<i64: 1, 2>}, {transform_indices = @transform_5, window_bounds = array<i64: 1>}, {transform_indices = @transform_6, window_bounds = array<i64: 6, 16, 128>}, {transform_indices = @transform_7, window_bounds = array<i64: 16, 128>}]} {
    %c0_i32 = arith.constant 0 : i32
    %c16_i32 = arith.constant 16 : i32
    %0 = arith.muli %c0_i32, %c16_i32 : i32
    %1 = tpu.assume_multiple %0, 16 : i32
    %c0 = arith.constant 0 : index
    %2 = arith.index_cast %1 : i32 to index
    %c0_0 = arith.constant 0 : index
    %3 = vector.load %arg7[%c0, %2, %c0_0] : memref<6x16x128xf32, #tpu.memory_space<vmem>>, vector<1x16x128xf32>
    %4 = vector.shape_cast %3 : vector<1x16x128xf32> to vector<16x128xf32>
    %c1 = arith.constant 1 : index
    %5 = arith.index_cast %1 : i32 to index
    %c0_1 = arith.constant 0 : index
    %6 = vector.load %arg7[%c1, %5, %c0_1] : memref<6x16x128xf32, #tpu.memory_space<vmem>>, vector<1x16x128xf32>
    %7 = vector.shape_cast %6 : vector<1x16x128xf32> to vector<16x128xf32>
    %c2 = arith.constant 2 : index
    %8 = arith.index_cast %1 : i32 to index
    %c0_2 = arith.constant 0 : index
    %9 = vector.load %arg7[%c2, %8, %c0_2] : memref<6x16x128xf32, #tpu.memory_space<vmem>>, vector<1x16x128xf32>
    %10 = vector.shape_cast %9 : vector<1x16x128xf32> to vector<16x128xf32>
    %c3 = arith.constant 3 : index
    %11 = arith.index_cast %1 : i32 to index
    %c0_3 = arith.constant 0 : index
    %12 = vector.load %arg7[%c3, %11, %c0_3] : memref<6x16x128xf32, #tpu.memory_space<vmem>>, vector<1x16x128xf32>
    %13 = vector.shape_cast %12 : vector<1x16x128xf32> to vector<16x128xf32>
    %c4 = arith.constant 4 : index
    %14 = arith.index_cast %1 : i32 to index
    %c0_4 = arith.constant 0 : index
    %15 = vector.load %arg7[%c4, %14, %c0_4] : memref<6x16x128xf32, #tpu.memory_space<vmem>>, vector<1x16x128xf32>
    %16 = vector.shape_cast %15 : vector<1x16x128xf32> to vector<16x128xf32>
    %c5 = arith.constant 5 : index
    %17 = arith.index_cast %1 : i32 to index
    %c0_5 = arith.constant 0 : index
    %18 = vector.load %arg7[%c5, %17, %c0_5] : memref<6x16x128xf32, #tpu.memory_space<vmem>>, vector<1x16x128xf32>
    %19 = vector.shape_cast %18 : vector<1x16x128xf32> to vector<16x128xf32>
    %c0_6 = arith.constant 0 : index
    %20 = memref.load %arg2[%c0_6] : memref<4xf32, #tpu.memory_space<smem>>
    %c0_7 = arith.constant 0 : index
    %c0_8 = arith.constant 0 : index
    %21 = memref.load %arg1[%c0_7, %c0_8] : memref<4x6xf32, #tpu.memory_space<smem>>
    %22 = vector.broadcast %21 : f32 to vector<16x128xf32>
    %23 = arith.mulf %22, %4 : vector<16x128xf32>
    %24 = vector.broadcast %20 : f32 to vector<16x128xf32>
    %25 = arith.addf %24, %23 : vector<16x128xf32>
    %c0_9 = arith.constant 0 : index
    %c1_10 = arith.constant 1 : index
    %26 = memref.load %arg1[%c0_9, %c1_10] : memref<4x6xf32, #tpu.memory_space<smem>>
    %27 = vector.broadcast %26 : f32 to vector<16x128xf32>
    %28 = arith.mulf %27, %7 : vector<16x128xf32>
    %29 = arith.addf %25, %28 : vector<16x128xf32>
    %c0_11 = arith.constant 0 : index
    %c2_12 = arith.constant 2 : index
    %30 = memref.load %arg1[%c0_11, %c2_12] : memref<4x6xf32, #tpu.memory_space<smem>>
    %31 = vector.broadcast %30 : f32 to vector<16x128xf32>
    %32 = arith.mulf %31, %10 : vector<16x128xf32>
    %33 = arith.addf %29, %32 : vector<16x128xf32>
    %c0_13 = arith.constant 0 : index
    %c3_14 = arith.constant 3 : index
    %34 = memref.load %arg1[%c0_13, %c3_14] : memref<4x6xf32, #tpu.memory_space<smem>>
    %35 = vector.broadcast %34 : f32 to vector<16x128xf32>
    %36 = arith.mulf %35, %13 : vector<16x128xf32>
    %37 = arith.addf %33, %36 : vector<16x128xf32>
    %c0_15 = arith.constant 0 : index
    %c4_16 = arith.constant 4 : index
    %38 = memref.load %arg1[%c0_15, %c4_16] : memref<4x6xf32, #tpu.memory_space<smem>>
    %39 = vector.broadcast %38 : f32 to vector<16x128xf32>
    %40 = arith.mulf %39, %16 : vector<16x128xf32>
    %41 = arith.addf %37, %40 : vector<16x128xf32>
    %c0_17 = arith.constant 0 : index
    %c5_18 = arith.constant 5 : index
    %42 = memref.load %arg1[%c0_17, %c5_18] : memref<4x6xf32, #tpu.memory_space<smem>>
    %43 = vector.broadcast %42 : f32 to vector<16x128xf32>
    %44 = arith.mulf %43, %19 : vector<16x128xf32>
    %45 = arith.addf %41, %44 : vector<16x128xf32>
    %cst = arith.constant 5.000000e-01 : f32
    %46 = vector.broadcast %cst : f32 to vector<16x128xf32>
    %47 = arith.mulf %46, %45 : vector<16x128xf32>
    %48 = math.tanh %47 : vector<16x128xf32>
    %cst_19 = arith.constant 1.000000e+00 : f32
    %49 = vector.broadcast %cst_19 : f32 to vector<16x128xf32>
    %50 = arith.addf %49, %48 : vector<16x128xf32>
    %cst_20 = arith.constant 5.000000e-01 : f32
    %51 = vector.broadcast %cst_20 : f32 to vector<16x128xf32>
    %52 = arith.mulf %51, %50 : vector<16x128xf32>
    %c1_21 = arith.constant 1 : index
    %53 = memref.load %arg2[%c1_21] : memref<4xf32, #tpu.memory_space<smem>>
    %c1_22 = arith.constant 1 : index
    %c0_23 = arith.constant 0 : index
    %54 = memref.load %arg1[%c1_22, %c0_23] : memref<4x6xf32, #tpu.memory_space<smem>>
    %55 = vector.broadcast %54 : f32 to vector<16x128xf32>
    %56 = arith.mulf %55, %4 : vector<16x128xf32>
    %57 = vector.broadcast %53 : f32 to vector<16x128xf32>
    %58 = arith.addf %57, %56 : vector<16x128xf32>
    %c1_24 = arith.constant 1 : index
    %c1_25 = arith.constant 1 : index
    %59 = memref.load %arg1[%c1_24, %c1_25] : memref<4x6xf32, #tpu.memory_space<smem>>
    %60 = vector.broadcast %59 : f32 to vector<16x128xf32>
    %61 = arith.mulf %60, %7 : vector<16x128xf32>
    %62 = arith.addf %58, %61 : vector<16x128xf32>
    %c1_26 = arith.constant 1 : index
    %c2_27 = arith.constant 2 : index
    %63 = memref.load %arg1[%c1_26, %c2_27] : memref<4x6xf32, #tpu.memory_space<smem>>
    %64 = vector.broadcast %63 : f32 to vector<16x128xf32>
    %65 = arith.mulf %64, %10 : vector<16x128xf32>
    %66 = arith.addf %62, %65 : vector<16x128xf32>
    %c1_28 = arith.constant 1 : index
    %c3_29 = arith.constant 3 : index
    %67 = memref.load %arg1[%c1_28, %c3_29] : memref<4x6xf32, #tpu.memory_space<smem>>
    %68 = vector.broadcast %67 : f32 to vector<16x128xf32>
    %69 = arith.mulf %68, %13 : vector<16x128xf32>
    %70 = arith.addf %66, %69 : vector<16x128xf32>
    %c1_30 = arith.constant 1 : index
    %c4_31 = arith.constant 4 : index
    %71 = memref.load %arg1[%c1_30, %c4_31] : memref<4x6xf32, #tpu.memory_space<smem>>
    %72 = vector.broadcast %71 : f32 to vector<16x128xf32>
    %73 = arith.mulf %72, %16 : vector<16x128xf32>
    %74 = arith.addf %70, %73 : vector<16x128xf32>
    %c1_32 = arith.constant 1 : index
    %c5_33 = arith.constant 5 : index
    %75 = memref.load %arg1[%c1_32, %c5_33] : memref<4x6xf32, #tpu.memory_space<smem>>
    %76 = vector.broadcast %75 : f32 to vector<16x128xf32>
    %77 = arith.mulf %76, %19 : vector<16x128xf32>
    %78 = arith.addf %74, %77 : vector<16x128xf32>
    %cst_34 = arith.constant 5.000000e-01 : f32
    %79 = vector.broadcast %cst_34 : f32 to vector<16x128xf32>
    %80 = arith.mulf %79, %78 : vector<16x128xf32>
    %81 = math.tanh %80 : vector<16x128xf32>
    %cst_35 = arith.constant 1.000000e+00 : f32
    %82 = vector.broadcast %cst_35 : f32 to vector<16x128xf32>
    %83 = arith.addf %82, %81 : vector<16x128xf32>
    %cst_36 = arith.constant 5.000000e-01 : f32
    %84 = vector.broadcast %cst_36 : f32 to vector<16x128xf32>
    %85 = arith.mulf %84, %83 : vector<16x128xf32>
    %c2_37 = arith.constant 2 : index
    %86 = memref.load %arg2[%c2_37] : memref<4xf32, #tpu.memory_space<smem>>
    %c2_38 = arith.constant 2 : index
    %c0_39 = arith.constant 0 : index
    %87 = memref.load %arg1[%c2_38, %c0_39] : memref<4x6xf32, #tpu.memory_space<smem>>
    %88 = vector.broadcast %87 : f32 to vector<16x128xf32>
    %89 = arith.mulf %88, %4 : vector<16x128xf32>
    %90 = vector.broadcast %86 : f32 to vector<16x128xf32>
    %91 = arith.addf %90, %89 : vector<16x128xf32>
    %c2_40 = arith.constant 2 : index
    %c1_41 = arith.constant 1 : index
    %92 = memref.load %arg1[%c2_40, %c1_41] : memref<4x6xf32, #tpu.memory_space<smem>>
    %93 = vector.broadcast %92 : f32 to vector<16x128xf32>
    %94 = arith.mulf %93, %7 : vector<16x128xf32>
    %95 = arith.addf %91, %94 : vector<16x128xf32>
    %c2_42 = arith.constant 2 : index
    %c2_43 = arith.constant 2 : index
    %96 = memref.load %arg1[%c2_42, %c2_43] : memref<4x6xf32, #tpu.memory_space<smem>>
    %97 = vector.broadcast %96 : f32 to vector<16x128xf32>
    %98 = arith.mulf %97, %10 : vector<16x128xf32>
    %99 = arith.addf %95, %98 : vector<16x128xf32>
    %c2_44 = arith.constant 2 : index
    %c3_45 = arith.constant 3 : index
    %100 = memref.load %arg1[%c2_44, %c3_45] : memref<4x6xf32, #tpu.memory_space<smem>>
    %101 = vector.broadcast %100 : f32 to vector<16x128xf32>
    %102 = arith.mulf %101, %13 : vector<16x128xf32>
    %103 = arith.addf %99, %102 : vector<16x128xf32>
    %c2_46 = arith.constant 2 : index
    %c4_47 = arith.constant 4 : index
    %104 = memref.load %arg1[%c2_46, %c4_47] : memref<4x6xf32, #tpu.memory_space<smem>>
    %105 = vector.broadcast %104 : f32 to vector<16x128xf32>
    %106 = arith.mulf %105, %16 : vector<16x128xf32>
    %107 = arith.addf %103, %106 : vector<16x128xf32>
    %c2_48 = arith.constant 2 : index
    %c5_49 = arith.constant 5 : index
    %108 = memref.load %arg1[%c2_48, %c5_49] : memref<4x6xf32, #tpu.memory_space<smem>>
    %109 = vector.broadcast %108 : f32 to vector<16x128xf32>
    %110 = arith.mulf %109, %19 : vector<16x128xf32>
    %111 = arith.addf %107, %110 : vector<16x128xf32>
    %cst_50 = arith.constant 5.000000e-01 : f32
    %112 = vector.broadcast %cst_50 : f32 to vector<16x128xf32>
    %113 = arith.mulf %112, %111 : vector<16x128xf32>
    %114 = math.tanh %113 : vector<16x128xf32>
    %cst_51 = arith.constant 1.000000e+00 : f32
    %115 = vector.broadcast %cst_51 : f32 to vector<16x128xf32>
    %116 = arith.addf %115, %114 : vector<16x128xf32>
    %cst_52 = arith.constant 5.000000e-01 : f32
    %117 = vector.broadcast %cst_52 : f32 to vector<16x128xf32>
    %118 = arith.mulf %117, %116 : vector<16x128xf32>
    %c3_53 = arith.constant 3 : index
    %119 = memref.load %arg2[%c3_53] : memref<4xf32, #tpu.memory_space<smem>>
    %c3_54 = arith.constant 3 : index
    %c0_55 = arith.constant 0 : index
    %120 = memref.load %arg1[%c3_54, %c0_55] : memref<4x6xf32, #tpu.memory_space<smem>>
    %121 = vector.broadcast %120 : f32 to vector<16x128xf32>
    %122 = arith.mulf %121, %4 : vector<16x128xf32>
    %123 = vector.broadcast %119 : f32 to vector<16x128xf32>
    %124 = arith.addf %123, %122 : vector<16x128xf32>
    %c3_56 = arith.constant 3 : index
    %c1_57 = arith.constant 1 : index
    %125 = memref.load %arg1[%c3_56, %c1_57] : memref<4x6xf32, #tpu.memory_space<smem>>
    %126 = vector.broadcast %125 : f32 to vector<16x128xf32>
    %127 = arith.mulf %126, %7 : vector<16x128xf32>
    %128 = arith.addf %124, %127 : vector<16x128xf32>
    %c3_58 = arith.constant 3 : index
    %c2_59 = arith.constant 2 : index
    %129 = memref.load %arg1[%c3_58, %c2_59] : memref<4x6xf32, #tpu.memory_space<smem>>
    %130 = vector.broadcast %129 : f32 to vector<16x128xf32>
    %131 = arith.mulf %130, %10 : vector<16x128xf32>
    %132 = arith.addf %128, %131 : vector<16x128xf32>
    %c3_60 = arith.constant 3 : index
    %c3_61 = arith.constant 3 : index
    %133 = memref.load %arg1[%c3_60, %c3_61] : memref<4x6xf32, #tpu.memory_space<smem>>
    %134 = vector.broadcast %133 : f32 to vector<16x128xf32>
    %135 = arith.mulf %134, %13 : vector<16x128xf32>
    %136 = arith.addf %132, %135 : vector<16x128xf32>
    %c3_62 = arith.constant 3 : index
    %c4_63 = arith.constant 4 : index
    %137 = memref.load %arg1[%c3_62, %c4_63] : memref<4x6xf32, #tpu.memory_space<smem>>
    %138 = vector.broadcast %137 : f32 to vector<16x128xf32>
    %139 = arith.mulf %138, %16 : vector<16x128xf32>
    %140 = arith.addf %136, %139 : vector<16x128xf32>
    %c3_64 = arith.constant 3 : index
    %c5_65 = arith.constant 5 : index
    %141 = memref.load %arg1[%c3_64, %c5_65] : memref<4x6xf32, #tpu.memory_space<smem>>
    %142 = vector.broadcast %141 : f32 to vector<16x128xf32>
    %143 = arith.mulf %142, %19 : vector<16x128xf32>
    %144 = arith.addf %140, %143 : vector<16x128xf32>
    %cst_66 = arith.constant 5.000000e-01 : f32
    %145 = vector.broadcast %cst_66 : f32 to vector<16x128xf32>
    %146 = arith.mulf %145, %144 : vector<16x128xf32>
    %147 = math.tanh %146 : vector<16x128xf32>
    %cst_67 = arith.constant 1.000000e+00 : f32
    %148 = vector.broadcast %cst_67 : f32 to vector<16x128xf32>
    %149 = arith.addf %148, %147 : vector<16x128xf32>
    %cst_68 = arith.constant 5.000000e-01 : f32
    %150 = vector.broadcast %cst_68 : f32 to vector<16x128xf32>
    %151 = arith.mulf %150, %149 : vector<16x128xf32>
    %c0_69 = arith.constant 0 : index
    %152 = memref.load %arg4[%c0_69] : memref<2xf32, #tpu.memory_space<smem>>
    %c0_70 = arith.constant 0 : index
    %c0_71 = arith.constant 0 : index
    %153 = memref.load %arg3[%c0_70, %c0_71] : memref<2x4xf32, #tpu.memory_space<smem>>
    %154 = vector.broadcast %153 : f32 to vector<16x128xf32>
    %155 = arith.mulf %154, %52 : vector<16x128xf32>
    %156 = vector.broadcast %152 : f32 to vector<16x128xf32>
    %157 = arith.addf %156, %155 : vector<16x128xf32>
    %c0_72 = arith.constant 0 : index
    %c1_73 = arith.constant 1 : index
    %158 = memref.load %arg3[%c0_72, %c1_73] : memref<2x4xf32, #tpu.memory_space<smem>>
    %159 = vector.broadcast %158 : f32 to vector<16x128xf32>
    %160 = arith.mulf %159, %85 : vector<16x128xf32>
    %161 = arith.addf %157, %160 : vector<16x128xf32>
    %c0_74 = arith.constant 0 : index
    %c2_75 = arith.constant 2 : index
    %162 = memref.load %arg3[%c0_74, %c2_75] : memref<2x4xf32, #tpu.memory_space<smem>>
    %163 = vector.broadcast %162 : f32 to vector<16x128xf32>
    %164 = arith.mulf %163, %118 : vector<16x128xf32>
    %165 = arith.addf %161, %164 : vector<16x128xf32>
    %c0_76 = arith.constant 0 : index
    %c3_77 = arith.constant 3 : index
    %166 = memref.load %arg3[%c0_76, %c3_77] : memref<2x4xf32, #tpu.memory_space<smem>>
    %167 = vector.broadcast %166 : f32 to vector<16x128xf32>
    %168 = arith.mulf %167, %151 : vector<16x128xf32>
    %169 = arith.addf %165, %168 : vector<16x128xf32>
    %cst_78 = arith.constant 5.000000e-01 : f32
    %170 = vector.broadcast %cst_78 : f32 to vector<16x128xf32>
    %171 = arith.mulf %170, %169 : vector<16x128xf32>
    %172 = math.tanh %171 : vector<16x128xf32>
    %cst_79 = arith.constant 1.000000e+00 : f32
    %173 = vector.broadcast %cst_79 : f32 to vector<16x128xf32>
    %174 = arith.addf %173, %172 : vector<16x128xf32>
    %cst_80 = arith.constant 5.000000e-01 : f32
    %175 = vector.broadcast %cst_80 : f32 to vector<16x128xf32>
    %176 = arith.mulf %175, %174 : vector<16x128xf32>
    %c1_81 = arith.constant 1 : index
    %177 = memref.load %arg4[%c1_81] : memref<2xf32, #tpu.memory_space<smem>>
    %c1_82 = arith.constant 1 : index
    %c0_83 = arith.constant 0 : index
    %178 = memref.load %arg3[%c1_82, %c0_83] : memref<2x4xf32, #tpu.memory_space<smem>>
    %179 = vector.broadcast %178 : f32 to vector<16x128xf32>
    %180 = arith.mulf %179, %52 : vector<16x128xf32>
    %181 = vector.broadcast %177 : f32 to vector<16x128xf32>
    %182 = arith.addf %181, %180 : vector<16x128xf32>
    %c1_84 = arith.constant 1 : index
    %c1_85 = arith.constant 1 : index
    %183 = memref.load %arg3[%c1_84, %c1_85] : memref<2x4xf32, #tpu.memory_space<smem>>
    %184 = vector.broadcast %183 : f32 to vector<16x128xf32>
    %185 = arith.mulf %184, %85 : vector<16x128xf32>
    %186 = arith.addf %182, %185 : vector<16x128xf32>
    %c1_86 = arith.constant 1 : index
    %c2_87 = arith.constant 2 : index
    %187 = memref.load %arg3[%c1_86, %c2_87] : memref<2x4xf32, #tpu.memory_space<smem>>
    %188 = vector.broadcast %187 : f32 to vector<16x128xf32>
    %189 = arith.mulf %188, %118 : vector<16x128xf32>
    %190 = arith.addf %186, %189 : vector<16x128xf32>
    %c1_88 = arith.constant 1 : index
    %c3_89 = arith.constant 3 : index
    %191 = memref.load %arg3[%c1_88, %c3_89] : memref<2x4xf32, #tpu.memory_space<smem>>
    %192 = vector.broadcast %191 : f32 to vector<16x128xf32>
    %193 = arith.mulf %192, %151 : vector<16x128xf32>
    %194 = arith.addf %190, %193 : vector<16x128xf32>
    %cst_90 = arith.constant 5.000000e-01 : f32
    %195 = vector.broadcast %cst_90 : f32 to vector<16x128xf32>
    %196 = arith.mulf %195, %194 : vector<16x128xf32>
    %197 = math.tanh %196 : vector<16x128xf32>
    %cst_91 = arith.constant 1.000000e+00 : f32
    %198 = vector.broadcast %cst_91 : f32 to vector<16x128xf32>
    %199 = arith.addf %198, %197 : vector<16x128xf32>
    %cst_92 = arith.constant 5.000000e-01 : f32
    %200 = vector.broadcast %cst_92 : f32 to vector<16x128xf32>
    %201 = arith.mulf %200, %199 : vector<16x128xf32>
    %c0_93 = arith.constant 0 : index
    %202 = memref.load %arg6[%c0_93] : memref<1xf32, #tpu.memory_space<smem>>
    %c0_94 = arith.constant 0 : index
    %c0_95 = arith.constant 0 : index
    %203 = memref.load %arg5[%c0_94, %c0_95] : memref<1x2xf32, #tpu.memory_space<smem>>
    %204 = vector.broadcast %203 : f32 to vector<16x128xf32>
    %205 = arith.mulf %204, %176 : vector<16x128xf32>
    %206 = vector.broadcast %202 : f32 to vector<16x128xf32>
    %207 = arith.addf %206, %205 : vector<16x128xf32>
    %c0_96 = arith.constant 0 : index
    %c1_97 = arith.constant 1 : index
    %208 = memref.load %arg5[%c0_96, %c1_97] : memref<1x2xf32, #tpu.memory_space<smem>>
    %209 = vector.broadcast %208 : f32 to vector<16x128xf32>
    %210 = arith.mulf %209, %201 : vector<16x128xf32>
    %211 = arith.addf %207, %210 : vector<16x128xf32>
    %cst_98 = arith.constant 5.000000e-01 : f32
    %212 = vector.broadcast %cst_98 : f32 to vector<16x128xf32>
    %213 = arith.mulf %212, %211 : vector<16x128xf32>
    %214 = math.tanh %213 : vector<16x128xf32>
    %cst_99 = arith.constant 1.000000e+00 : f32
    %215 = vector.broadcast %cst_99 : f32 to vector<16x128xf32>
    %216 = arith.addf %215, %214 : vector<16x128xf32>
    %cst_100 = arith.constant 5.000000e-01 : f32
    %217 = vector.broadcast %cst_100 : f32 to vector<16x128xf32>
    %218 = arith.mulf %217, %216 : vector<16x128xf32>
    %219 = arith.index_cast %1 : i32 to index
    %c0_101 = arith.constant 0 : index
    %220 = vector.load %arg8[%219, %c0_101] : memref<16x128xf32, #tpu.memory_space<vmem>>, vector<16x128xf32>
    tpu.vector_store %arg8[%219, %c0_101], %218 {strides = array<i32>} : memref<16x128xf32, #tpu.memory_space<vmem>>, vector<16x128xf32>,
    %c1_i32 = arith.constant 1 : i32
    return
  }
  func.func @transform_0(%arg0: i32) -> (i32, i32) {
    %c0_i32 = arith.constant 0 : i32
    %c0_i32_0 = arith.constant 0 : i32
    %c0_i32_1 = arith.constant 0 : i32
    return %c0_i32, %c0_i32_0 : i32, i32
  }
  func.func @transform_1(%arg0: i32) -> i32 {
    %c0_i32 = arith.constant 0 : i32
    %c0_i32_0 = arith.constant 0 : i32
    return %c0_i32 : i32
  }
  func.func @transform_2(%arg0: i32) -> (i32, i32) {
    %c0_i32 = arith.constant 0 : i32
    %c0_i32_0 = arith.constant 0 : i32
    %c0_i32_1 = arith.constant 0 : i32
    return %c0_i32, %c0_i32_0 : i32, i32
  }
  func.func @transform_3(%arg0: i32) -> i32 {
    %c0_i32 = arith.constant 0 : i32
    %c0_i32_0 = arith.constant 0 : i32
    return %c0_i32 : i32
  }
  func.func @transform_4(%arg0: i32) -> (i32, i32) {
    %c0_i32 = arith.constant 0 : i32
    %c0_i32_0 = arith.constant 0 : i32
    %c0_i32_1 = arith.constant 0 : i32
    return %c0_i32, %c0_i32_0 : i32, i32
  }
  func.func @transform_5(%arg0: i32) -> i32 {
    %c0_i32 = arith.constant 0 : i32
    %c0_i32_0 = arith.constant 0 : i32
    return %c0_i32 : i32
  }
  func.func @transform_6(%arg0: i32) -> (i32, i32, i32) {
    %c0_i32 = arith.constant 0 : i32
    %c0_i32_0 = arith.constant 0 : i32
    %c0_i32_1 = arith.constant 0 : i32
    return %c0_i32, %arg0, %c0_i32_0 : i32, i32, i32
  }
  func.func @transform_7(%arg0: i32) -> (i32, i32) {
    %c0_i32 = arith.constant 0 : i32
    %c0_i32_0 = arith.constant 0 : i32
    return %arg0, %c0_i32 : i32, i32
  }
}

</mosaic_0001>

<llo_original>
// kernel: tpu_custom_call.1
$region0: #{tpu_custom_call.1}
  #allocation0 [shape = 'u32[]', space=smem, size = 0x4, offset = 0x4, fixed_abs, tag = 'smem constant byte address 0x4 - core index']
  #allocation1 [shape = 'u32[144,128]{1,0:T(1,128)}', space=vmem, size = 0x12000, scoped, tag = 'internal scratch']
  #allocation2 [shape = 'f32[1]{0:T(128)S(6)}', space=smem, size = 0x200, scoped, tag = 'scoped memory for tpu_custom_call.1']
  %s0 = inlined_call_operand.hbm [shape: f32[4,6], index: 0, kind: input, shape index: {}]
  %s1 = inlined_call_operand.vmem [shape: f32[4], index: 1, kind: input, shape index: {}]
  %s2 = inlined_call_operand.vmem [shape: f32[2,4], index: 2, kind: input, shape index: {}]
  %s3 = inlined_call_operand.vmem [shape: f32[2], index: 3, kind: input, shape index: {}]
  %s4 = inlined_call_operand.vmem [shape: f32[1,2], index: 4, kind: input, shape index: {}]
  %s5 = inlined_call_operand.<no memory space> [shape: f32[1], index: 5, kind: input, shape index: {}]
  %s6 = inlined_call_operand.hbm [shape: f32[6,16,128], index: 6, kind: input, shape index: {}]
  %s7 = inlined_call_operand.hbm [shape: f32[16,128], index: 7, kind: output, shape index: {}]
  %s8 = sld [smem:[#allocation0]]
  $region62: #{tpu_custom_call.1} parent=0
    _
  %s10 = ssub.s32 1, %s8
  %s11 = scalar_select 0, %s10, %s8
  %12 = sst [smem:[#allocation2]] %s5
  $region1: #{tpu_custom_call.1} parent=0
    #allocation3 [shape = 'u8[2048]{0}', space=smem, size = 0x800, scoped, tag = 'input window, operand 0, single buffered']
    #allocation4 [shape = 's32[1]{0}', space=sflag, size = 0x4, scoped, tag = 'scoped memory for tpu_custom_call.1']
    #allocation5 [shape = 's32[1]{0}', space=sflag, size = 0x4, scoped, tag = 'scoped memory for tpu_custom_call.1']
    #allocation6 [shape = 's32[1]{0}', space=sflag, size = 0x4, scoped, tag = 'scoped memory for tpu_custom_call.1']
    #allocation7 [shape = 's32[1]{0}', space=sflag, size = 0x4, scoped, tag = 'scoped memory for tpu_custom_call.1']
    #allocation8 [shape = 'u8[512]{0}', space=smem, size = 0x200, scoped, tag = 'input window, operand 1, single buffered']
    #allocation9 [shape = 'u8[1024]{0}', space=smem, size = 0x400, scoped, tag = 'input window, operand 2, single buffered']
    #allocation10 [shape = 's32[1]{0}', space=sflag, size = 0x4, scoped, tag = 'scoped memory for tpu_custom_call.1']
    #allocation11 [shape = 'u8[512]{0}', space=smem, size = 0x200, scoped, tag = 'input window, operand 3, single buffered']
    #allocation12 [shape = 'u8[512]{0}', space=smem, size = 0x200, scoped, tag = 'input window, operand 4, single buffered']
    #allocation13 [shape = 's32[1]{0}', space=sflag, size = 0x4, scoped, tag = 'scoped memory for tpu_custom_call.1']
    #allocation14 [shape = 'u8[49152]{0}', space=vmem, size = 0xc000, scoped, tag = 'input window, operand 6, single buffered']
    #allocation15 [shape = 'u8[8192]{0}', space=vmem, size = 0x2000, scoped, tag = 'output window, operand 0, single buffered']
    %13 = vsyncpa [#allocation6], 0
    %14 = vsyncpa [#allocation7], 0
    %15 = vsyncpa [#allocation10], 0
    %16 = vsyncpa [#allocation13], 0
    %17 = vsyncpa [#allocation4], 0
    %18 = vsyncpa [#allocation5], 0
    // Predicated region
    $region2: #{tpu_custom_call.1} parent=1 // pred_check
      _
    $region3: #{tpu_custom_call.1} parent=1 // pred_check_branch
      %20 = sbr.rel (0) target = $region5
    $region4: #{tpu_custom_call.1} parent=1 // pred_region
      %s22 = ssub.s32 64, 64
      %23 = vsyncadd [#allocation6], %s22
      %26 = dma.hbm_to_smem %s0, 64, [#allocation3], [#allocation6]
    $region5: #{tpu_custom_call.1} parent=1 // pred_fallthru
      _
    // Predicated region
    $region6: #{tpu_custom_call.1} parent=1 // pred_check
      _
    $region7: #{tpu_custom_call.1} parent=1 // pred_check_branch
      %28 = sbr.rel (0) target = $region9
    $region8: #{tpu_custom_call.1} parent=1 // pred_region
      %s30 = ssub.s32 16, 16
      %31 = vsyncadd [#allocation7], %s30
      %s33 = sshll.u32 %s1, 4
      %s34 = int_to_ptr.vmem [resolvable:$true] %s33
      %36 = dma.vmem_to_smem %s34, 16, [#allocation8], [#allocation7]
    $region9: #{tpu_custom_call.1} parent=1 // pred_fallthru
      _
    // Predicated region
    $region10: #{tpu_custom_call.1} parent=1 // pred_check
      _
    $region11: #{tpu_custom_call.1} parent=1 // pred_check_branch
      %38 = sbr.rel (0) target = $region13
    $region12: #{tpu_custom_call.1} parent=1 // pred_region
      %s40 = ssub.s32 32, 32
      %41 = vsyncadd [#allocation10], %s40
      %s43 = sshll.u32 %s2, 4
      %s44 = int_to_ptr.vmem [resolvable:$true] %s43
      %46 = dma.vmem_to_smem %s44, 32, [#allocation9], [#allocation10]
    $region13: #{tpu_custom_call.1} parent=1 // pred_fallthru
      _
    // Predicated region
    $region14: #{tpu_custom_call.1} parent=1 // pred_check
      _
    $region15: #{tpu_custom_call.1} parent=1 // pred_check_branch
      %48 = sbr.rel (0) target = $region17
    $region16: #{tpu_custom_call.1} parent=1 // pred_region
      %s50 = ssub.s32 16, 16
      %51 = vsyncadd [#allocation10], %s50
      %s53 = sshll.u32 %s3, 4
      %s54 = int_to_ptr.vmem [resolvable:$true] %s53
      %56 = dma.vmem_to_smem %s54, 16, [#allocation11], [#allocation10]
    $region17: #{tpu_custom_call.1} parent=1 // pred_fallthru
      _
    // Predicated region
    $region18: #{tpu_custom_call.1} parent=1 // pred_check
      _
    $region19: #{tpu_custom_call.1} parent=1 // pred_check_branch
      %58 = sbr.rel (0) target = $region21
    $region20: #{tpu_custom_call.1} parent=1 // pred_region
      %s60 = ssub.s32 16, 16
      %61 = vsyncadd [#allocation13], %s60
      %s63 = sshll.u32 %s4, 4
      %s64 = int_to_ptr.vmem [resolvable:$true] %s63
      %66 = dma.vmem_to_smem %s64, 16, [#allocation12], [#allocation13]
    $region21: #{tpu_custom_call.1} parent=1 // pred_fallthru
      _
    // Predicated region
    $region22: #{tpu_custom_call.1} parent=1 // pred_check
      _
    $region23: #{tpu_custom_call.1} parent=1 // pred_check_branch
      %68 = sbr.rel (0) target = $region25
    $region24: #{tpu_custom_call.1} parent=1 // pred_region
      _
    $region25: #{tpu_custom_call.1} parent=1 // pred_fallthru
      _
    // Predicated region
    $region26: #{tpu_custom_call.1} parent=1 // pred_check
      _
    $region27: #{tpu_custom_call.1} parent=1 // pred_check_branch
      %70 = sbr.rel (0) target = $region29
    $region28: #{tpu_custom_call.1} parent=1 // pred_region
      %s72 = ssub.s32 1536, 1536
      %73 = vsyncadd [#allocation4], %s72
      %s74 = sshll.u32 [#allocation14], 4
      %s75 = int_to_ptr.vmem [resolvable:$true] %s74
      %80 = dma.hbm_to_vmem [thread:$0]  %s6, 1536, %s75, [#allocation4], 128, 128, 8
    $region29: #{tpu_custom_call.1} parent=1 // pred_fallthru
      _
    // Predicated region
    $region30: #{tpu_custom_call.1} parent=1 // pred_check
      _
    $region31: #{tpu_custom_call.1} parent=1 // pred_check_branch
      %82 = sbr.rel (0) target = $region33
    $region32: #{tpu_custom_call.1} parent=1 // pred_region
      %83 = dma.done [#allocation6], 64
    $region33: #{tpu_custom_call.1} parent=1 // pred_fallthru
      _
    // Predicated region
    $region34: #{tpu_custom_call.1} parent=1 // pred_check
      _
    $region35: #{tpu_custom_call.1} parent=1 // pred_check_branch
      %85 = sbr.rel (0) target = $region37
    $region36: #{tpu_custom_call.1} parent=1 // pred_region
      %86 = dma.done [#allocation7], 16
    $region37: #{tpu_custom_call.1} parent=1 // pred_fallthru
      _
    // Predicated region
    $region38: #{tpu_custom_call.1} parent=1 // pred_check
      _
    $region39: #{tpu_custom_call.1} parent=1 // pred_check_branch
      %88 = sbr.rel (0) target = $region41
    $region40: #{tpu_custom_call.1} parent=1 // pred_region
      %89 = dma.done [#allocation10], 32
    $region41: #{tpu_custom_call.1} parent=1 // pred_fallthru
      _
    // Predicated region
    $region42: #{tpu_custom_call.1} parent=1 // pred_check
      _
    $region43: #{tpu_custom_call.1} parent=1 // pred_check_branch
      %91 = sbr.rel (0) target = $region45
    $region44: #{tpu_custom_call.1} parent=1 // pred_region
      %92 = dma.done [#allocation10], 16
    $region45: #{tpu_custom_call.1} parent=1 // pred_fallthru
      _
    // Predicated region
    $region46: #{tpu_custom_call.1} parent=1 // pred_check
      _
    $region47: #{tpu_custom_call.1} parent=1 // pred_check_branch
      %94 = sbr.rel (0) target = $region49
    $region48: #{tpu_custom_call.1} parent=1 // pred_region
      %95 = dma.done [#allocation13], 16
    $region49: #{tpu_custom_call.1} parent=1 // pred_fallthru
      _
    // Predicated region
    $region50: #{tpu_custom_call.1} parent=1 // pred_check
      _
    $region51: #{tpu_custom_call.1} parent=1 // pred_check_branch
      %97 = sbr.rel (0) target = $region53
    $region52: #{tpu_custom_call.1} parent=1 // pred_region
      %98 = dma.done [#allocation4], 1536
    $region53: #{tpu_custom_call.1} parent=1 // pred_fallthru
      _
    %99 = sfence
    %v100 = vld [vmem:[#allocation14] sm:$0xff]
    %v101 = vld [vmem:[#allocation14 + $0x8] sm:$0xff]
    %s102 = sadd.s32 0, 16
    %s103 = scalar_lea.vmem [#allocation14], %s102
    %v104 = vld [vmem:[%s103] sm:$0xff]
    %v105 = vld [vmem:[%s103 + $0x8] sm:$0xff]
    %s106 = sadd.s32 0, 32
    %s107 = scalar_lea.vmem [#allocation14], %s106
    %v108 = vld [vmem:[%s107] sm:$0xff]
    %v109 = vld [vmem:[%s107 + $0x8] sm:$0xff]
    %s110 = sadd.s32 0, 48
    %s111 = scalar_lea.vmem [#allocation14], %s110
    %v112 = vld [vmem:[%s111] sm:$0xff]
    %v113 = vld [vmem:[%s111 + $0x8] sm:$0xff]
    %s114 = sadd.s32 0, 64
    %s115 = scalar_lea.vmem [#allocation14], %s114
    %v116 = vld [vmem:[%s115] sm:$0xff]
    %v117 = vld [vmem:[%s115 + $0x8] sm:$0xff]
    %s118 = sadd.s32 0, 80
    %s119 = scalar_lea.vmem [#allocation14], %s118
    %v120 = vld [vmem:[%s119] sm:$0xff]
    %v121 = vld [vmem:[%s119 + $0x8] sm:$0xff]
    %s122 = sld [smem:[#allocation8]]
    %s123 = sld [smem:[#allocation3]]
    %v124 = vstv %s123
    %v125 = vmul.f32 %v124, %v100
    %v126 = vmul.f32 %v124, %v101
    %v127 = vstv %s122
    %v128 = vadd.f32 %v127, %v125
    %v129 = vadd.f32 %v127, %v126
    %s130 = sld [smem:[#allocation3 + $0x1]]
    %v131 = vstv %s130
    %v132 = vmul.f32 %v131, %v104
    %v133 = vmul.f32 %v131, %v105
    %v134 = vadd.f32 %v128, %v132
    %v135 = vadd.f32 %v129, %v133
    %s136 = sld [smem:[#allocation3 + $0x2]]
    %v137 = vstv %s136
    %v138 = vmul.f32 %v137, %v108
    %v139 = vmul.f32 %v137, %v109
    %v140 = vadd.f32 %v134, %v138
    %v141 = vadd.f32 %v135, %v139
    %s142 = sld [smem:[#allocation3 + $0x3]]
    %v143 = vstv %s142
    %v144 = vmul.f32 %v143, %v112
    %v145 = vmul.f32 %v143, %v113
    %v146 = vadd.f32 %v140, %v144
    %v147 = vadd.f32 %v141, %v145
    %s148 = sld [smem:[#allocation3 + $0x4]]
    %v149 = vstv %s148
    %v150 = vmul.f32 %v149, %v116
    %v151 = vmul.f32 %v149, %v117
    %v152 = vadd.f32 %v146, %v150
    %v153 = vadd.f32 %v147, %v151
    %s154 = sld [smem:[#allocation3 + $0x5]]
    %v155 = vstv %s154
    %v156 = vmul.f32 %v155, %v120
    %v157 = vmul.f32 %v155, %v121
    %v158 = vadd.f32 %v152, %v156
    %v159 = vadd.f32 %v153, %v157
    %v160 = vmul.f32 %v158, 0.5
    %v161 = vmul.f32 %v159, 0.5
    %v162 = vtanh.pop %v160
    %v163 = vtanh.pop %v161
    %v164 = vadd.f32 %v162, 1.0
    %v165 = vadd.f32 %v163, 1.0
    %v166 = vmul.f32 %v164, 0.5
    %v167 = vmul.f32 %v165, 0.5
    %s168 = sld [smem:[#allocation8 + $0x1]]
    %s169 = sld [smem:[#allocation3 + $0x80]]
    %v170 = vstv %s169
    %v171 = vmul.f32 %v170, %v100
    %v172 = vmul.f32 %v170, %v101
    %v173 = vstv %s168
    %v174 = vadd.f32 %v173, %v171
    %v175 = vadd.f32 %v173, %v172
    %s176 = sld [smem:[#allocation3 + $0x81]]
    %v177 = vstv %s176
    %v178 = vmul.f32 %v177, %v104
    %v179 = vmul.f32 %v177, %v105
    %v180 = vadd.f32 %v174, %v178
    %v181 = vadd.f32 %v175, %v179
    %s182 = sld [smem:[#allocation3 + $0x82]]
    %v183 = vstv %s182
    %v184 = vmul.f32 %v183, %v108
    %v185 = vmul.f32 %v183, %v109
    %v186 = vadd.f32 %v180, %v184
    %v187 = vadd.f32 %v181, %v185
    %s188 = sld [smem:[#allocation3 + $0x83]]
    %v189 = vstv %s188
    %v190 = vmul.f32 %v189, %v112
    %v191 = vmul.f32 %v189, %v113
    %v192 = vadd.f32 %v186, %v190
    %v193 = vadd.f32 %v187, %v191
    %s194 = sld [smem:[#allocation3 + $0x84]]
    %v195 = vstv %s194
    %v196 = vmul.f32 %v195, %v116
    %v197 = vmul.f32 %v195, %v117
    %v198 = vadd.f32 %v192, %v196
    %v199 = vadd.f32 %v193, %v197
    %s200 = sld [smem:[#allocation3 + $0x85]]
    %v201 = vstv %s200
    %v202 = vmul.f32 %v201, %v120
    %v203 = vmul.f32 %v201, %v121
    %v204 = vadd.f32 %v198, %v202
    %v205 = vadd.f32 %v199, %v203
    %v206 = vmul.f32 %v204, 0.5
    %v207 = vmul.f32 %v205, 0.5
    %v208 = vtanh.pop %v206
    %v209 = vtanh.pop %v207
    %v210 = vadd.f32 %v208, 1.0
    %v211 = vadd.f32 %v209, 1.0
    %v212 = vmul.f32 %v210, 0.5
    %v213 = vmul.f32 %v211, 0.5
    %s214 = sld [smem:[#allocation8 + $0x2]]
    %s215 = sld [smem:[#allocation3 + $0x100]]
    %v216 = vstv %s215
    %v217 = vmul.f32 %v216, %v100
    %v218 = vmul.f32 %v216, %v101
    %v219 = vstv %s214
    %v220 = vadd.f32 %v219, %v217
    %v221 = vadd.f32 %v219, %v218
    %s222 = sld [smem:[#allocation3 + $0x101]]
    %v223 = vstv %s222
    %v224 = vmul.f32 %v223, %v104
    %v225 = vmul.f32 %v223, %v105
    %v226 = vadd.f32 %v220, %v224
    %v227 = vadd.f32 %v221, %v225
    %s228 = sld [smem:[#allocation3 + $0x102]]
    %v229 = vstv %s228
    %v230 = vmul.f32 %v229, %v108
    %v231 = vmul.f32 %v229, %v109
    %v232 = vadd.f32 %v226, %v230
    %v233 = vadd.f32 %v227, %v231
    %s234 = sld [smem:[#allocation3 + $0x103]]
    %v235 = vstv %s234
    %v236 = vmul.f32 %v235, %v112
    %v237 = vmul.f32 %v235, %v113
    %v238 = vadd.f32 %v232, %v236
    %v239 = vadd.f32 %v233, %v237
    %s240 = sld [smem:[#allocation3 + $0x104]]
    %v241 = vstv %s240
    %v242 = vmul.f32 %v241, %v116
    %v243 = vmul.f32 %v241, %v117
    %v244 = vadd.f32 %v238, %v242
    %v245 = vadd.f32 %v239, %v243
    %s246 = sld [smem:[#allocation3 + $0x105]]
    %v247 = vstv %s246
    %v248 = vmul.f32 %v247, %v120
    %v249 = vmul.f32 %v247, %v121
    %v250 = vadd.f32 %v244, %v248
    %v251 = vadd.f32 %v245, %v249
    %v252 = vmul.f32 %v250, 0.5
    %v253 = vmul.f32 %v251, 0.5
    %v254 = vtanh.pop %v252
    %v255 = vtanh.pop %v253
    %v256 = vadd.f32 %v254, 1.0
    %v257 = vadd.f32 %v255, 1.0
    %v258 = vmul.f32 %v256, 0.5
    %v259 = vmul.f32 %v257, 0.5
    %s260 = sld [smem:[#allocation8 + $0x3]]
    %s261 = sld [smem:[#allocation3 + $0x180]]
    %v262 = vstv %s261
    %v263 = vmul.f32 %v262, %v100
    %v264 = vmul.f32 %v262, %v101
    %v265 = vstv %s260
    %v266 = vadd.f32 %v265, %v263
    %v267 = vadd.f32 %v265, %v264
    %s268 = sld [smem:[#allocation3 + $0x181]]
    %v269 = vstv %s268
    %v270 = vmul.f32 %v269, %v104
    %v271 = vmul.f32 %v269, %v105
    %v272 = vadd.f32 %v266, %v270
    %v273 = vadd.f32 %v267, %v271
    %s274 = sld [smem:[#allocation3 + $0x182]]
    %v275 = vstv %s274
    %v276 = vmul.f32 %v275, %v108
    %v277 = vmul.f32 %v275, %v109
    %v278 = vadd.f32 %v272, %v276
    %v279 = vadd.f32 %v273, %v277
    %s280 = sld [smem:[#allocation3 + $0x183]]
    %v281 = vstv %s280
    %v282 = vmul.f32 %v281, %v112
    %v283 = vmul.f32 %v281, %v113
    %v284 = vadd.f32 %v278, %v282
    %v285 = vadd.f32 %v279, %v283
    %s286 = sld [smem:[#allocation3 + $0x184]]
    %v287 = vstv %s286
    %v288 = vmul.f32 %v287, %v116
    %v289 = vmul.f32 %v287, %v117
    %v290 = vadd.f32 %v284, %v288
    %v291 = vadd.f32 %v285, %v289
    %s292 = sld [smem:[#allocation3 + $0x185]]
    %v293 = vstv %s292
    %v294 = vmul.f32 %v293, %v120
    %v295 = vmul.f32 %v293, %v121
    %v296 = vadd.f32 %v290, %v294
    %v297 = vadd.f32 %v291, %v295
    %v298 = vmul.f32 %v296, 0.5
    %v299 = vmul.f32 %v297, 0.5
    %v300 = vtanh.pop %v298
    %v301 = vtanh.pop %v299
    %v302 = vadd.f32 %v300, 1.0
    %v303 = vadd.f32 %v301, 1.0
    %v304 = vmul.f32 %v302, 0.5
    %v305 = vmul.f32 %v303, 0.5
    %s306 = sld [smem:[#allocation11]]
    %s307 = sld [smem:[#allocation9]]
    %v308 = vstv %s307
    %v309 = vmul.f32 %v308, %v166
    %v310 = vmul.f32 %v308, %v167
    %v311 = vstv %s306
    %v312 = vadd.f32 %v311, %v309
    %v313 = vadd.f32 %v311, %v310
    %s314 = sld [smem:[#allocation9 + $0x1]]
    %v315 = vstv %s314
    %v316 = vmul.f32 %v315, %v212
    %v317 = vmul.f32 %v315, %v213
    %v318 = vadd.f32 %v312, %v316
    %v319 = vadd.f32 %v313, %v317
    %s320 = sld [smem:[#allocation9 + $0x2]]
    %v321 = vstv %s320
    %v322 = vmul.f32 %v321, %v258
    %v323 = vmul.f32 %v321, %v259
    %v324 = vadd.f32 %v318, %v322
    %v325 = vadd.f32 %v319, %v323
    %s326 = sld [smem:[#allocation9 + $0x3]]
    %v327 = vstv %s326
    %v328 = vmul.f32 %v327, %v304
    %v329 = vmul.f32 %v327, %v305
    %v330 = vadd.f32 %v324, %v328
    %v331 = vadd.f32 %v325, %v329
    %v332 = vmul.f32 %v330, 0.5
    %v333 = vmul.f32 %v331, 0.5
    %v334 = vtanh.pop %v332
    %v335 = vtanh.pop %v333
    %v336 = vadd.f32 %v334, 1.0
    %v337 = vadd.f32 %v335, 1.0
    %v338 = vmul.f32 %v336, 0.5
    %v339 = vmul.f32 %v337, 0.5
    %s340 = sld [smem:[#allocation11 + $0x1]]
    %s341 = sld [smem:[#allocation9 + $0x80]]
    %v342 = vstv %s341
    %v343 = vmul.f32 %v342, %v166
    %v344 = vmul.f32 %v342, %v167
    %v345 = vstv %s340
    %v346 = vadd.f32 %v345, %v343
    %v347 = vadd.f32 %v345, %v344
    %s348 = sld [smem:[#allocation9 + $0x81]]
    %v349 = vstv %s348
    %v350 = vmul.f32 %v349, %v212
    %v351 = vmul.f32 %v349, %v213
    %v352 = vadd.f32 %v346, %v350
    %v353 = vadd.f32 %v347, %v351
    %s354 = sld [smem:[#allocation9 + $0x82]]
    %v355 = vstv %s354
    %v356 = vmul.f32 %v355, %v258
    %v357 = vmul.f32 %v355, %v259
    %v358 = vadd.f32 %v352, %v356
    %v359 = vadd.f32 %v353, %v357
    %s360 = sld [smem:[#allocation9 + $0x83]]
    %v361 = vstv %s360
    %v362 = vmul.f32 %v361, %v304
    %v363 = vmul.f32 %v361, %v305
    %v364 = vadd.f32 %v358, %v362
    %v365 = vadd.f32 %v359, %v363
    %v366 = vmul.f32 %v364, 0.5
    %v367 = vmul.f32 %v365, 0.5
    %v368 = vtanh.pop %v366
    %v369 = vtanh.pop %v367
    %v370 = vadd.f32 %v368, 1.0
    %v371 = vadd.f32 %v369, 1.0
    %v372 = vmul.f32 %v370, 0.5
    %v373 = vmul.f32 %v371, 0.5
    %s374 = sld [smem:[#allocation2]]
    %s375 = sld [smem:[#allocation12]]
    %v376 = vstv %s375
    %v377 = vmul.f32 %v376, %v338
    %v378 = vmul.f32 %v376, %v339
    %v379 = vstv %s374
    %v380 = vadd.f32 %v379, %v377
    %v381 = vadd.f32 %v379, %v378
    %s382 = sld [smem:[#allocation12 + $0x1]]
    %v383 = vstv %s382
    %v384 = vmul.f32 %v383, %v372
    %v385 = vmul.f32 %v383, %v373
    %v386 = vadd.f32 %v380, %v384
    %v387 = vadd.f32 %v381, %v385
    %v388 = vmul.f32 %v386, 0.5
    %v389 = vmul.f32 %v387, 0.5
    %v390 = vtanh.pop %v388
    %v391 = vtanh.pop %v389
    %v392 = vadd.f32 %v390, 1.0
    %v393 = vadd.f32 %v391, 1.0
    %v394 = vmul.f32 %v392, 0.5
    %v395 = vmul.f32 %v393, 0.5
    %396 = vst [vmem:[#allocation15] sm:$0xff] %v394
    %397 = vst [vmem:[#allocation15 + $0x8] sm:$0xff] %v395
    // Predicated region
    $region54: #{tpu_custom_call.1} parent=1 // pred_check
      _
    $region55: #{tpu_custom_call.1} parent=1 // pred_check_branch
      %399 = sbr.rel (0) target = $region57
    $region56: #{tpu_custom_call.1} parent=1 // pred_region
      %s401 = ssub.s32 256, 256
      %402 = vsyncadd [#allocation5], %s401
      %s403 = sshll.u32 [#allocation15], 4
      %s404 = int_to_ptr.vmem [resolvable:$true] %s403
      %409 = dma.vmem_to_hbm [thread:$0]  %s404, 256, %s7, [#allocation5], 128, 128, 8
    $region57: #{tpu_custom_call.1} parent=1 // pred_fallthru
      _
    // Predicated region
    $region58: #{tpu_custom_call.1} parent=1 // pred_check
      _
    $region59: #{tpu_custom_call.1} parent=1 // pred_check_branch
      %411 = sbr.rel (0) target = $region61
    $region60: #{tpu_custom_call.1} parent=1 // pred_region
      %412 = dma.done [#allocation5], 256
    $region61: #{tpu_custom_call.1} parent=1 // pred_fallthru
      _
    %413 = vsyncpa [#allocation4], 1
    %414 = vsyncpa [#allocation5], 1
    %415 = vsyncpa [#allocation6], 1
    %416 = vsyncpa [#allocation7], 1
    %417 = vsyncpa [#allocation10], 1
    %418 = vsyncpa [#allocation13], 1

</llo_original>
